<compile_context>
chip_gen: v7x
topology: tpu7x:2x2x1
jax: 0.10.0
libtpu: 0.0.40
codegen_flags: <defaults>
</compile_context>

<pallas_src>
import math

import jax
import jax.numpy as jnp
from jax.experimental import pallas as pl
from jax.experimental.pallas import tpu as pltpu

_EPS = 1e-5


def _round_up(x, m):
    return ((x + m - 1) // m) * m


# --------------------- pass 0: per-tile channel statistics ---------------------
def _stats_kernel(x_ref, st_ref):
    x = x_ref[...]
    st_ref[0, 0:1, :] = jnp.sum(x, axis=0, keepdims=True)
    st_ref[0, 1:2, :] = jnp.sum(x * x, axis=0, keepdims=True)


# ------------- pass 1: relu(bn1(x)) @ w1 (1x1) + partial stats of y1 -----------
def _make_stage1_kernel(mm_dtype):
    prec = jax.lax.Precision.HIGHEST if mm_dtype == jnp.float32 else None

    def kernel(x_ref, sc_ref, w_ref, y_ref, st_ref):
        x = x_ref[...]
        h1 = jnp.maximum(x * sc_ref[0:1, :] + sc_ref[1:2, :], 0.0)
        y = jnp.dot(h1.astype(mm_dtype), w_ref[...],
                    precision=prec, preferred_element_type=jnp.float32)
        y_ref[...] = y
        st_ref[0, 0:1, :] = jnp.sum(y, axis=0, keepdims=True)
        st_ref[0, 1:2, :] = jnp.sum(y * y, axis=0, keepdims=True)

    return kernel


# ------ pass 2: relu(bn2(y1)) -> 3x3 conv via zero-padded scratch + 9 dots ------
def _make_stage2_kernel(n_tile, h, w, p, m_dot_pad, mm_dtype):
    wp = w + 2                 # padded row width
    dp = (h + 2) * wp          # padded rows per image
    prec = jax.lax.Precision.HIGHEST if mm_dtype == jnp.float32 else None

    def kernel(y1_ref, sc_ref, w2_ref, y2_ref, st_ref, h2p_ref):
        # bn2 + relu (f32)
        h2 = jnp.maximum(y1_ref[...] * sc_ref[0:1, :] + sc_ref[1:2, :], 0.0)

        # Zero the padded spatial scratch, then scatter the interior rows with
        # static slices (padding rows stay zero -> zero-padding "for free").
        h2p_ref[...] = jnp.zeros_like(h2p_ref)
        for i in range(n_tile):
            for yy in range(h):
                src = i * h * w + yy * w
                dst = i * dp + (yy + 1) * wp + 1
                h2p_ref[dst:dst + w, :] = h2[src:src + w, :]

        # 9 accumulated K=P dots over shifted row windows of the padded scratch
        # (no rolls, no masks, no lane concatenate).
        acc = jnp.zeros((m_dot_pad, p), jnp.float32)
        for t in range(9):
            off = (t // 3) * wp + (t % 3)
            tap = h2p_ref[off:off + m_dot_pad, :].astype(mm_dtype)
            acc = acc + jnp.dot(tap, w2_ref[t],
                                precision=prec,
                                preferred_element_type=jnp.float32)

        # acc row (i*dp + yy*wp + xx) holds output pixel (i, yy, xx): compact it.
        for i in range(n_tile):
            for yy in range(h):
                src = i * dp + yy * wp
                dst = i * h * w + yy * w
                y2_ref[dst:dst + w, :] = acc[src:src + w, :]

        y2 = y2_ref[...]
        st_ref[0, 0:1, :] = jnp.sum(y2, axis=0, keepdims=True)
        st_ref[0, 1:2, :] = jnp.sum(y2 * y2, axis=0, keepdims=True)

    return kernel


# --------------- pass 3: relu(bn3(y2)) @ w3 (1x1) + residual add ----------------
def _make_stage3_kernel(mm_dtype):
    prec = jax.lax.Precision.HIGHEST if mm_dtype == jnp.float32 else None

    def kernel(y2_ref, x_ref, sc_ref, w_ref, out_ref):
        h3 = jnp.maximum(y2_ref[...] * sc_ref[0:1, :] + sc_ref[1:2, :], 0.0)
        y3 = jnp.dot(h3.astype(mm_dtype), w_ref[...],
                     precision=prec, preferred_element_type=jnp.float32)
        out_ref[...] = y3 + x_ref[...]

    return kernel


# ----------------------------------- wrapper ------------------------------------
def preact_bottleneck_nhwc(x_nhwc, w1, w2, w3, g1, b1, g2, b2, g3, b3,
                           *, images_per_step=1, matmul_dtype=jnp.bfloat16):
    """x_nhwc: (N,H,W,C0); w1: (C0,P); w2: (3,3,P,P) HWIO; w3: (P,4P); g*/b*: (C,).

    images_per_step: whole images per grid step (no 3x3 halo logic needed).
      Larger => bigger M tiles (better MXU / DMA amortization) but more VMEM.
      v5e/v6e (128 MiB VMEM) can use ~2x the tile of v7x (64 MiB VMEM).
    matmul_dtype: jnp.bfloat16 (full MXU rate on v6e/v7x) or jnp.float32
      (exact module semantics; ~3x slower matmuls).
    """
    n, h, w, c0 = x_nhwc.shape
    p = w1.shape[1]
    assert c0 == 4 * p, "identity residual requires in_planes == 4 * out_planes"
    assert n % images_per_step == 0, "batch must be divisible by images_per_step"

    f32 = jnp.float32
    nt = images_per_step
    g = n // nt                       # grid size (batch tiles)
    mt = nt * h * w                   # activation rows per grid step
    m = n * h * w                     # total rows (per-channel BN count)

    # Padded-scratch geometry for the 3x3 conv.
    wp = w + 2
    dp = (h + 2) * wp
    m_dot_pad = _round_up(nt * dp, 8)
    rows_scr = m_dot_pad + _round_up(2 * wp + 2, 8)

    xf = x_nhwc.reshape(m, c0).astype(f32)                 # (M, C0) lane-dense slab
    w1m = w1.astype(matmul_dtype)                          # (C0, P)
    w2m = w2.astype(matmul_dtype).reshape(9, p, p)         # (kh,kw,Cin,Cout)->(9,P,P)
    w3m = w3.astype(matmul_dtype)                          # (P, 4P)

    cparams = pltpu.CompilerParams(
        dimension_semantics=("parallel",),                 # pipelining + v7x megacore
        vmem_limit_bytes=32 * 1024 * 1024,                 # raise for big tiles on v5e/v6e
    )

    def scale_shift(sum_, sumsq, gamma, beta, count):
        # Training-mode BN (biased variance), folded into y*scale + shift. f32.
        mu = sum_ / count
        var = sumsq / count - mu * mu
        scale = gamma.astype(f32) * jax.lax.rsqrt(var + _EPS)
        shift = beta.astype(f32) - mu * scale
        return jnp.stack([scale, shift], axis=0)           # (2, C)

    # ---- pass 0: bn1 statistics over x -------------------------------------
    st1 = pl.pallas_call(
        _stats_kernel,
        out_shape=jax.ShapeDtypeStruct((g, 2, c0), f32),
        grid=(g,),
        in_specs=[pl.BlockSpec((mt, c0), lambda i: (i, 0))],
        out_specs=pl.BlockSpec((1, 2, c0), lambda i: (i, 0, 0)),
        compiler_params=cparams,
    )(xf)
    st1 = jnp.sum(st1, axis=0)
    sc1 = scale_shift(st1[0], st1[1], g1, b1, m)

    # ---- pass 1: relu(bn1(x)) @ w1, plus partial stats of y1 ----------------
    y1, st2 = pl.pallas_call(
        _make_stage1_kernel(matmul_dtype),
        out_shape=(jax.ShapeDtypeStruct((m, p), f32),
                   jax.ShapeDtypeStruct((g, 2, p), f32)),
        grid=(g,),
        in_specs=[pl.BlockSpec((mt, c0), lambda i: (i, 0)),
                  pl.BlockSpec((2, c0), lambda i: (0, 0)),      # fetched once
                  pl.BlockSpec((c0, p), lambda i: (0, 0))],     # fetched once
        out_specs=(pl.BlockSpec((mt, p), lambda i: (i, 0)),
                   pl.BlockSpec((1, 2, p), lambda i: (i, 0, 0))),
        compiler_params=cparams,
    )(xf, sc1, w1m)
    st2 = jnp.sum(st2, axis=0)
    sc2 = scale_shift(st2[0], st2[1], g2, b2, m)

    # ---- pass 2: relu(bn2(y1)) -> 3x3 conv, plus partial stats of y2 --------
    y2, st3 = pl.pallas_call(
        _make_stage2_kernel(nt, h, w, p, m_dot_pad, matmul_dtype),
        out_shape=(jax.ShapeDtypeStruct((m, p), f32),
                   jax.ShapeDtypeStruct((g, 2, p), f32)),
        grid=(g,),
        in_specs=[pl.BlockSpec((mt, p), lambda i: (i, 0)),
                  pl.BlockSpec((2, p), lambda i: (0, 0)),
                  pl.BlockSpec((9, p, p), lambda i: (0, 0, 0))],
        out_specs=(pl.BlockSpec((mt, p), lambda i: (i, 0)),
                   pl.BlockSpec((1, 2, p), lambda i: (i, 0, 0))),
        scratch_shapes=[pltpu.VMEM((rows_scr, p), f32)],
        compiler_params=cparams,
    )(y1, sc2, w2m)
    st3 = jnp.sum(st3, axis=0)
    sc3 = scale_shift(st3[0], st3[1], g3, b3, m)

    # ---- pass 3: relu(bn3(y2)) @ w3 + residual -------------------------------
    out2d = pl.pallas_call(
        _make_stage3_kernel(matmul_dtype),
        out_shape=jax.ShapeDtypeStruct((m, c0), f32),
        grid=(g,),
        in_specs=[pl.BlockSpec((mt, p), lambda i: (i, 0)),
                  pl.BlockSpec((mt, c0), lambda i: (i, 0)),
                  pl.BlockSpec((2, p), lambda i: (0, 0)),
                  pl.BlockSpec((p, c0), lambda i: (0, 0))],
        out_specs=pl.BlockSpec((mt, c0), lambda i: (i, 0)),
        compiler_params=cparams,
    )(y2, xf, sc3, w3m)

    return out2d.reshape(n, h, w, c0)


def preact_bottleneck_nchw(x_nchw, params, **kwargs):
    """PyTorch-convention entry point: NCHW in, NCHW out."""
    x_nhwc = jnp.transpose(x_nchw, (0, 2, 3, 1))
    out = preact_bottleneck_nhwc(x_nhwc, *params, **kwargs)
    return jnp.transpose(out, (0, 3, 1, 2))


# ----------------------------- reference (plain JAX) ----------------------------
def ref_forward_nhwc(x, w1, w2, w3, g1, b1, g2, b2, g3, b3):
    def bn_relu(y, g, b):
        mu = y.mean(axis=(0, 1, 2), keepdims=True)
        var = ((y - mu) ** 2).mean(axis=(0, 1, 2), keepdims=True)
        yh = (y - mu) / jnp.sqrt(var + _EPS)
        return jax.nn.relu(yh * g.reshape(1, 1, 1, -1) + b.reshape(1, 1, 1, -1))

    dn = ("NHWC", "HWIO", "NHWC")
    h1 = bn_relu(x, g1, b1)
    y1 = jax.lax.conv_general_dilated(
        h1, w1.reshape(1, 1, *w1.shape), (1, 1), "VALID", dimension_numbers=dn)
    h2 = bn_relu(y1, g2, b2)
    y2 = jax.lax.conv_general_dilated(
        h2, w2, (1, 1), ((1, 1), (1, 1)), dimension_numbers=dn)
    h3 = bn_relu(y2, g3, b3)
    y3 = jax.lax.conv_general_dilated(
        h3, w3.reshape(1, 1, *w3.shape), (1, 1), "VALID", dimension_numbers=dn)
    return y3 + x


if __name__ == "__main__":
    # Realistic PreActResNet bottleneck widths at toy spatial size:
    # in_planes = 4 * out_planes = 128 -> x / residual / output rows are full
    # 128-lane vregs (lane-dense I/O); the batch axis gives a 2-step parallel grid.
    N, H, W = 2, 8, 8
    OUT_PLANES = 32
    IN_PLANES = OUT_PLANES * 4  # 128

    key = jax.random.PRNGKey(0)
    ks = jax.random.split(key, 10)

    x_nchw = jax.random.normal(ks[0], (N, IN_PLANES, H, W), jnp.float32)

    # Conv weights in PyTorch OIHW, He-style scale.
    w1_oihw = jax.random.normal(ks[1], (OUT_PLANES, IN_PLANES, 1, 1), jnp.float32) \
        * math.sqrt(2.0 / IN_PLANES)
    w2_oihw = jax.random.normal(ks[2], (OUT_PLANES, OUT_PLANES, 3, 3), jnp.float32) \
        * math.sqrt(2.0 / (OUT_PLANES * 9))
    w3_oihw = jax.random.normal(ks[3], (OUT_PLANES * 4, OUT_PLANES, 1, 1), jnp.float32) \
        * math.sqrt(2.0 / OUT_PLANES)

    # BatchNorm affine params (perturbed around PyTorch default gamma=1, beta=0).
    g1 = 1.0 + 0.1 * jax.random.normal(ks[4], (IN_PLANES,), jnp.float32)
    b1 = 0.1 * jax.random.normal(ks[5], (IN_PLANES,), jnp.float32)
    g2 = 1.0 + 0.1 * jax.random.normal(ks[6], (OUT_PLANES,), jnp.float32)
    b2 = 0.1 * jax.random.normal(ks[7], (OUT_PLANES,), jnp.float32)
    g3 = 1.0 + 0.1 * jax.random.normal(ks[8], (OUT_PLANES,), jnp.float32)
    b3 = 0.1 * jax.random.normal(ks[9], (OUT_PLANES,), jnp.float32)

    # Kernel-friendly weight layouts.
    w1 = jnp.transpose(w1_oihw[:, :, 0, 0], (1, 0))        # (C_in, P)
    w2 = jnp.transpose(w2_oihw, (2, 3, 1, 0))              # (kh, kw, C_in, C_out) HWIO
    w3 = jnp.transpose(w3_oihw[:, :, 0, 0], (1, 0))        # (P, 4P)

    params = (w1, w2, w3, g1, b1, g2, b2, g3, b3)

    # f32 reference with full-precision matmuls (module semantics).
    x_nhwc = jnp.transpose(x_nchw, (0, 2, 3, 1))
    with jax.default_matmul_precision("float32"):
        ref_nhwc = ref_forward_nhwc(x_nhwc, *params)
    ref_nchw = jnp.transpose(ref_nhwc, (0, 3, 1, 2))

    # 1) f32-operand kernel path: checks the kernel logic tightly vs the module.
    out_f32 = preact_bottleneck_nchw(x_nchw, params,
                                     images_per_step=1, matmul_dtype=jnp.float32)
    out_f32 = jax.block_until_ready(out_f32)
    assert out_f32.shape == x_nchw.shape
    err_f32 = float(jnp.max(jnp.abs(out_f32 - ref_nchw)))
    assert err_f32 < 2e-3, f"f32 path max abs error vs reference: {err_f32}"

    # 2) bf16-operand / f32-accumulate path (the perf default for v6e/v7x).
    out_bf16 = preact_bottleneck_nchw(x_nchw, params,
                                      images_per_step=1, matmul_dtype=jnp.bfloat16)
    out_bf16 = jax.block_until_ready(out_bf16)
    err_bf16 = float(jnp.max(jnp.abs(out_bf16 - ref_nchw)))
    assert err_bf16 < 5e-2, f"bf16 path max abs error vs reference: {err_bf16}"

    print("KERNEL_OK")
</pallas_src>

<mosaic_0001>
module attributes {stable_mosaic.version = 11 : i64} {
  func.func @_stats_kernel(%arg0: i32, %arg1: memref<64x128xf32, #tpu.memory_space<vmem>>, %arg2: memref<1x2x128xf32, #tpu.memory_space<vmem>>) attributes {dimension_semantics = [#tpu.dimension_semantics<parallel>], iteration_bounds = array<i64: 2>, scalar_prefetch = 0 : i64, scratch_operands = 0 : i64, tpu.core_type = #tpu.core_type<tc>, window_params = [{transform_indices = @transform_0, window_bounds = array<i64: 64, 128>}, {transform_indices = @transform_1, window_bounds = array<i64: 1, 2, 128>}]} {
    %c0 = arith.constant 0 : index
    %c0_0 = arith.constant 0 : index
    %0 = vector.load %arg1[%c0, %c0_0] : memref<64x128xf32, #tpu.memory_space<vmem>>, vector<64x128xf32>
    %cst = arith.constant dense<0.000000e+00> : vector<128xf32>
    %1 = vector.multi_reduction <add>, %0, %cst [0] : vector<64x128xf32> to vector<128xf32>
    %2 = vector.shape_cast %1 : vector<128xf32> to vector<1x128xf32>
    %c0_1 = arith.constant 0 : index
    %c0_2 = arith.constant 0 : index
    %c0_3 = arith.constant 0 : index
    %3 = vector.load %arg2[%c0_1, %c0_2, %c0_3] : memref<1x2x128xf32, #tpu.memory_space<vmem>>, vector<1x1x128xf32>
    %4 = vector.shape_cast %3 : vector<1x1x128xf32> to vector<1x128xf32>
    %5 = vector.shape_cast %2 : vector<1x128xf32> to vector<1x1x128xf32>
    tpu.vector_store %arg2[%c0_1, %c0_2, %c0_3], %5 {strides = array<i32>} : memref<1x2x128xf32, #tpu.memory_space<vmem>>, vector<1x1x128xf32>,
    %6 = arith.mulf %0, %0 : vector<64x128xf32>
    %cst_4 = arith.constant dense<0.000000e+00> : vector<128xf32>
    %7 = vector.multi_reduction <add>, %6, %cst_4 [0] : vector<64x128xf32> to vector<128xf32>
    %8 = vector.shape_cast %7 : vector<128xf32> to vector<1x128xf32>
    %c0_5 = arith.constant 0 : index
    %c1 = arith.constant 1 : index
    %c0_6 = arith.constant 0 : index
    %9 = vector.load %arg2[%c0_5, %c1, %c0_6] : memref<1x2x128xf32, #tpu.memory_space<vmem>>, vector<1x1x128xf32>
    %10 = vector.shape_cast %9 : vector<1x1x128xf32> to vector<1x128xf32>
    %11 = vector.shape_cast %8 : vector<1x128xf32> to vector<1x1x128xf32>
    tpu.vector_store %arg2[%c0_5, %c1, %c0_6], %11 {strides = array<i32>} : memref<1x2x128xf32, #tpu.memory_space<vmem>>, vector<1x1x128xf32>,
    return
  }
  func.func @transform_0(%arg0: i32) -> (i32, i32) {
    %c0_i32 = arith.constant 0 : i32
    %c0_i32_0 = arith.constant 0 : i32
    return %arg0, %c0_i32 : i32, i32
  }
  func.func @transform_1(%arg0: i32) -> (i32, i32, i32) {
    %c0_i32 = arith.constant 0 : i32
    %c0_i32_0 = arith.constant 0 : i32
    %c0_i32_1 = arith.constant 0 : i32
    return %arg0, %c0_i32, %c0_i32_0 : i32, i32, i32
  }
}

</mosaic_0001>

<llo_original>
// kernel: tpu_custom_call.1
$region0: #{tpu_custom_call.1}
  #allocation0 [shape = 'u32[]', space=smem, size = 0x4, offset = 0x4, fixed_abs, tag = 'smem constant byte address 0x4 - core index']
  #allocation1 [shape = 'u32[144,128]{1,0:T(1,128)}', space=vmem, size = 0x12000, scoped, tag = 'internal scratch']
  %s0 = inlined_call_operand.hbm [shape: f32[128,128], index: 0, kind: input, shape index: {}]
  %s1 = inlined_call_operand.hbm [shape: f32[2,2,128], index: 1, kind: output, shape index: {}]
  %s2 = sld [smem:[#allocation0]]
  $region41: #{tpu_custom_call.1} parent=0
    _
  %s4 = ssub.s32 1, %s2
  %s5 = scalar_select 0, %s4, %s2
  $region1: #{tpu_custom_call.1} parent=0
    #allocation2 [shape = 'u8[65536]{0}', space=vmem, size = 0x10000, scoped, tag = 'input window, operand 0']
    #allocation3 [shape = 's32[2]{0}', space=sflag, size = 0x8, scoped, tag = 'scoped memory for tpu_custom_call.1']
    #allocation4 [shape = 's32[2]{0}', space=sflag, size = 0x8, scoped, tag = 'scoped memory for tpu_custom_call.1']
    #allocation5 [shape = 'u8[2048]{0}', space=vmem, size = 0x800, scoped, tag = 'output window, operand 0']
    %6 = vsyncpa [#allocation3], 0
    %s7 = scalar_lea.sflag [#allocation3], 1
    %8 = vsyncpa %s7, 0
    %9 = vsyncpa [#allocation4], 0
    %s10 = scalar_lea.sflag [#allocation4], 1
    %11 = vsyncpa %s10, 0
    loop: start=0, step=1, limit=4
    $region2: #{tpu_custom_call.1} parent=1 // loop_pre_header
      _
    $region3: #{tpu_custom_call.1} parent=1 // loop_header
      %s13 = sphi 0, %s17
      %p14 = scmp.ge.s32.totalorder %s13, 4
      %s23 = sphi 0, %s25
      %s26 = sphi 0, %s23
      %s27 = sphi 0, %s26
      %s43 = sphi 0, %s27
      %s49 = sphi 0, %s51
      %s52 = sphi 0, %s49
      %s53 = sphi 0, %s52
      %s69 = sphi 0, %s53
    $region4: #{tpu_custom_call.1} parent=1 // loop_header_branch
      %16 = sbr.rel (%p14) target = $region8
    $region5: #{tpu_custom_call.1} parent=1 // loop_body
      %s18 = ssub.s32 %s13, 1
      %s19 = ssub.s32 %s13, 2
      %s20 = sadd.s32 %s13, 1
      %s21 = ssub.s32 %s13, %s20
      %p22 = scmp.eq.s32.totalorder %s21, 0
      %s24 = sadd.s32 %s23, 1
      %s25 = scalar_select %p22, %s23, %s24
      %p28 = pneg %p22
      %p29 = scmp.eq.s32.totalorder %s13, 1
      %p30 = por %p28, %p29
      %p31 = scmp.ne.s32.totalorder %s23, %s26
      %p32 = scmp.eq.s32.totalorder %s13, 0
      %p33 = por %p31, %p32
      %p34 = scmp.ne.s32.totalorder %s23, %s26
      %p35 = scmp.eq.s32.totalorder %s18, 1
      %p36 = por %p34, %p35
      %p37 = scmp.ne.s32.totalorder %s26, %s27
      %p38 = scmp.eq.s32.totalorder %s18, 0
      %p39 = por %p37, %p38
      %p40 = scmp.ne.s32.totalorder %s26, %s27
      %p41 = scmp.eq.s32.totalorder %s19, 1
      %p42 = por %p40, %p41
      %p44 = scmp.ne.s32.totalorder %s27, %s43
      %p45 = scmp.eq.s32.totalorder %s19, 0
      %p46 = por %p44, %p45
      %s47 = ssub.s32 %s13, %s20
      %p48 = scmp.eq.s32.totalorder %s47, 0
      %s50 = sadd.s32 %s49, 1
      %s51 = scalar_select %p48, %s49, %s50
      %p54 = pneg %p48
      %p55 = scmp.eq.s32.totalorder %s13, 1
      %p56 = por %p54, %p55
      %p57 = scmp.ne.s32.totalorder %s49, %s52
      %p58 = scmp.eq.s32.totalorder %s13, 0
      %p59 = por %p57, %p58
      %p60 = scmp.ne.s32.totalorder %s49, %s52
      %p61 = scmp.eq.s32.totalorder %s18, 1
      %p62 = por %p60, %p61
      %p63 = scmp.ne.s32.totalorder %s52, %s53
      %p64 = scmp.eq.s32.totalorder %s18, 0
      %p65 = por %p63, %p64
      %p66 = scmp.ne.s32.totalorder %s52, %s53
      %p67 = scmp.eq.s32.totalorder %s19, 1
      %p68 = por %p66, %p67
      %p70 = scmp.ne.s32.totalorder %s53, %s69
      %p71 = scmp.eq.s32.totalorder %s19, 0
      %p72 = por %p70, %p71
      %p73 = scmp.le.s32.totalorder 1, %s13
      %p74 = scmp.lt.s32.totalorder %s13, 3
      %p75 = pnand %p73, %p74
      %p76 = pneg %p75
      // Predicated region
      $region9: #{tpu_custom_call.1} parent=5 // pred_check
        _
      $region10: #{tpu_custom_call.1} parent=5 // pred_check_branch
        %78 = sbr.rel (%p75) target = $region12
      $region11: #{tpu_custom_call.1} parent=5 // pred_region
        %s79 = ssub.s32 %s13, 1
      $region12: #{tpu_custom_call.1} parent=5 // pred_fallthru
        _
      %p80 = scmp.lt.s32.totalorder %s13, 2
      // Predicated region
      $region13: #{tpu_custom_call.1} parent=5 // pred_check
        %p81 = pneg %p80
      $region14: #{tpu_custom_call.1} parent=5 // pred_check_branch
        %83 = sbr.rel (%p81) target = $region16
      $region15: #{tpu_custom_call.1} parent=5 // pred_region
        // Predicated region
        $region17: #{tpu_custom_call.1} parent=15 // pred_check
          %p84 = pneg %p33
        $region18: #{tpu_custom_call.1} parent=15 // pred_check_branch
          %86 = sbr.rel (%p84) target = $region20
        $region19: #{tpu_custom_call.1} parent=15 // pred_region
          %s87 = sand.u32 %s23, 1
          %s88 = scalar_lea.sflag [#allocation3], %s87
          %s89 = sand.u32 %s23, 1
          %s90 = smul.addr %s89, 64
          %s91 = scalar_lea.vmem [#allocation2], %s90
          %s92 = smul.u32 8, %s13
          %s94 = ssub.s32 1024, 1024
          %95 = vsyncadd %s88, %s94
          %s96 = smul.addr %s92, 128
          %s97 = scalar_lea.hbm %s0, %s96
          %s98 = sshll.u32 %s91, 4
          %s99 = int_to_ptr.vmem [resolvable:$true] %s98
          %104 = dma.hbm_to_vmem [thread:$0]  %s97, 1024, %s99, %s88, 128, 128, 8
        $region20: #{tpu_custom_call.1} parent=15 // pred_fallthru
          _
      $region16: #{tpu_custom_call.1} parent=5 // pred_fallthru
        _
      %p105 = scmp.le.s32.totalorder 1, %s13
      %p106 = scmp.lt.s32.totalorder %s13, 3
      %p107 = pnand %p105, %p106
      %p108 = pneg %p107
      // Predicated region
      $region21: #{tpu_custom_call.1} parent=5 // pred_check
        _
      $region22: #{tpu_custom_call.1} parent=5 // pred_check_branch
        %110 = sbr.rel (%p107) target = $region24
      $region23: #{tpu_custom_call.1} parent=5 // pred_region
        %s111 = ssub.s32 %s13, 1
        %s112 = sand.u32 %s26, 1
        %s113 = scalar_lea.sflag [#allocation3], %s112
        %s114 = sand.u32 %s26, 1
        %s115 = smul.addr %s114, 64
        %s116 = scalar_lea.vmem [#allocation2], %s115
        // Predicated region
        $region25: #{tpu_custom_call.1} parent=23 // pred_check
          %p117 = pneg %p39
        $region26: #{tpu_custom_call.1} parent=23 // pred_check_branch
          %119 = sbr.rel (%p117) target = $region28
        $region27: #{tpu_custom_call.1} parent=23 // pred_region
          %120 = dma.done %s113, 1024
        $region28: #{tpu_custom_call.1} parent=23 // pred_fallthru
          _
        %s121 = sand.u32 %s26, 1
        %s122 = scalar_lea.sflag [#allocation3], %s121
        %s123 = sand.u32 %s26, 1
        %s124 = smul.addr %s123, 64
        %s125 = scalar_lea.vmem [#allocation2], %s124
        %p126 = pneg %p39
        %p127 = pneg %p36
        %p128 = pneg %p65
        %p129 = pneg %p62
        %s130 = sand.u32 %s52, 1
        %s131 = scalar_lea.sflag [#allocation4], %s130
        %s132 = sand.u32 %s52, 1
        %s133 = smul.addr %s132, 2
        %s134 = scalar_lea.vmem [#allocation5], %s133
        %s135 = smul.u32 8, %s18
        %v136 = vld [vmem:[%s116] sm:$0xff]
        %v137 = vld [vmem:[%s116 + $0x8] sm:$0xff]
        %v138 = vld [vmem:[%s116 + $0x10] sm:$0xff]
        %v139 = vld [vmem:[%s116 + $0x18] sm:$0xff]
        %v140 = vld [vmem:[%s116 + $0x20] sm:$0xff]
        %v141 = vld [vmem:[%s116 + $0x28] sm:$0xff]
        %v142 = vld [vmem:[%s116 + $0x30] sm:$0xff]
        %v143 = vld [vmem:[%s116 + $0x38] sm:$0xff]
        %v144 = vadd.f32 %v136, %v137
        %v145 = vadd.f32 %v144, %v138
        %v146 = vadd.f32 %v145, %v139
        %v147 = vadd.f32 %v146, %v140
        %v148 = vadd.f32 %v147, %v141
        %v149 = vadd.f32 %v148, %v142
        %v150 = vadd.f32 %v149, %v143
        %v151 = vrot.slane %v150, 4
        %v152 = vadd.f32 %v150, %v151
        %v153 = vrot.slane %v152, 2
        %v154 = vadd.f32 %v152, %v153
        %v155 = vrot.slane %v154, 1
        %v156 = vadd.f32 %v154, %v155
        %157 = vst [vmem:[%s134] sm:$0x1] %v156
        %v158 = vmul.f32 %v136, %v136
        %v159 = vmul.f32 %v137, %v137
        %v160 = vmul.f32 %v138, %v138
        %v161 = vmul.f32 %v139, %v139
        %v162 = vmul.f32 %v140, %v140
        %v163 = vmul.f32 %v141, %v141
        %v164 = vmul.f32 %v142, %v142
        %v165 = vmul.f32 %v143, %v143
        %v166 = vadd.f32 %v158, %v159
        %v167 = vadd.f32 %v166, %v160
        %v168 = vadd.f32 %v167, %v161
        %v169 = vadd.f32 %v168, %v162
        %v170 = vadd.f32 %v169, %v163
        %v171 = vadd.f32 %v170, %v164
        %v172 = vadd.f32 %v171, %v165
        %v173 = vrot.slane %v172, 4
        %v174 = vadd.f32 %v172, %v173
        %v175 = vrot.slane %v174, 2
        %v176 = vadd.f32 %v174, %v175
        %v177 = vrot.slane %v176, 1
        %v178 = vadd.f32 %v176, %v177
        %179 = vst [vmem:[%s134 + $0x1] sm:$0x1] %v178
        %s180 = sand.u32 %s52, 1
        %s181 = scalar_lea.sflag [#allocation4], %s180
        %s182 = sand.u32 %s52, 1
        %s183 = smul.addr %s182, 2
        %s184 = scalar_lea.vmem [#allocation5], %s183
        // Predicated region
        $region29: #{tpu_custom_call.1} parent=23 // pred_check
          %p185 = pneg %p62
        $region30: #{tpu_custom_call.1} parent=23 // pred_check_branch
          %187 = sbr.rel (%p185) target = $region32
        $region31: #{tpu_custom_call.1} parent=23 // pred_region
          %s189 = ssub.s32 32, 32
          %190 = vsyncadd %s181, %s189
          %s191 = smul.addr %s18, 32
          %s192 = scalar_lea.hbm %s1, %s191
          %s194 = sshll.u32 %s184, 4
          %s195 = int_to_ptr.vmem [resolvable:$true] %s194
          %197 = dma.vmem_to_hbm [thread:$0]  %s195, 32, %s192, %s181
        $region32: #{tpu_custom_call.1} parent=23 // pred_fallthru
          _
      $region24: #{tpu_custom_call.1} parent=5 // pred_fallthru
        _
      %p198 = scmp.le.s32.totalorder 2, %s13
      // Predicated region
      $region33: #{tpu_custom_call.1} parent=5 // pred_check
        %p199 = pneg %p198
      $region34: #{tpu_custom_call.1} parent=5 // pred_check_branch
        %201 = sbr.rel (%p199) target = $region36
      $region35: #{tpu_custom_call.1} parent=5 // pred_region
        %s202 = ssub.s32 %s13, 2
        // Predicated region
        $region37: #{tpu_custom_call.1} parent=35 // pred_check
          %p203 = pneg %p68
        $region38: #{tpu_custom_call.1} parent=35 // pred_check_branch
          %205 = sbr.rel (%p203) target = $region40
        $region39: #{tpu_custom_call.1} parent=35 // pred_region
          %s206 = sand.u32 %s53, 1
          %s207 = scalar_lea.sflag [#allocation4], %s206
          %s208 = sand.u32 %s53, 1
          %s209 = smul.addr %s208, 2
          %s210 = scalar_lea.vmem [#allocation5], %s209
          %211 = dma.done %s207, 32
        $region40: #{tpu_custom_call.1} parent=35 // pred_fallthru
          _
      $region36: #{tpu_custom_call.1} parent=5 // pred_fallthru
        _
    $region6: #{tpu_custom_call.1} parent=1 // loop_footer
      %s17 = sadd.s32 1, %s13
    $region7: #{tpu_custom_call.1} parent=1 // loop_footer_branch
      %12 = sbr.rel target = $region3
    $region8: #{tpu_custom_call.1} parent=1 // loop_exit
      _
    %212 = vsyncpa [#allocation3], 1
    %s213 = scalar_lea.sflag [#allocation3], 1
    %214 = vsyncpa %s213, 1
    %215 = vsyncpa [#allocation4], 1
    %s216 = scalar_lea.sflag [#allocation4], 1
    %217 = vsyncpa %s216, 1

</llo_original>
